<compile_context>
chip_gen: v7x
topology: tpu7x:2x2x1
jax: 0.10.0
libtpu: 0.0.40
codegen_flags: <defaults>
</compile_context>

<pallas_src>
import jax
import jax.numpy as jnp
from jax.experimental import pallas as pl
from jax.experimental.pallas import tpu as pltpu


def _round_up(x: int, m: int) -> int:
    return ((x + m - 1) // m) * m


def cnn_kernel(emb_ref, wconv_ref, bconv_ref, wfc_ref, bfc_ref, out_ref):
    # emb_ref:   (Bt, LEp) bf16  flattened (pad-token padded) embeddings, this tile
    # wconv_ref: (LEp, F)  bf16  conv weights with AvgPool folded in (zero pad rows)
    # bconv_ref: (1, F)    f32   conv bias
    # wfc_ref:   (F, 1)    f32   fc weight as a column
    # bfc_ref:   (1, 1)    f32   fc bias
    # out_ref:   (1, Bt)   f32   lane-dense sigmoid outputs for this tile
    pooled = jnp.dot(emb_ref[...], wconv_ref[...],
                     preferred_element_type=jnp.float32)            # (Bt, F)  MXU
    h = jnp.maximum(pooled + bconv_ref[...], 0.0)                   # ReLU     VPU
    # FC (F -> 1): transpose to (F, Bt) so the reduction runs over sublanes and the
    # bias-add / sigmoid / store are all lane-dense (no masked vst, no 1/128-lane work).
    hT = h.T                                                        # (F, Bt)  XLU
    logits = jnp.sum(hT * wfc_ref[...], axis=0, keepdims=True)      # (1, Bt)
    out_ref[...] = jax.nn.sigmoid(logits + bfc_ref[...])


def cnn_forward(x, emb_w, conv_w, conv_b, fc_w, fc_b, *, b_tile=None):
    """Forward pass matching cnn.forward semantics.

    x:      (B, L) int token ids
    emb_w:  (V, E)      embedding table (self.embed weights)
    conv_w: (F, E, K)   Conv1d weight (out_ch, in_ch, kernel)
    conv_b: (F,)        Conv1d bias
    fc_w:   (1, F)      Linear weight
    fc_b:   (1,)        Linear bias
    returns (B, 1) float32 sigmoid outputs
    """
    B, L = x.shape
    F_, E, K = conv_w.shape
    T = L - K + 1                       # conv output length == AvgPool1d window
    LE = L * E
    LE_pad = _round_up(LE, 128)         # 240 -> 256: clean lane-aligned contraction

    # --- batch tile ------------------------------------------------------------
    # Big enough to hide the ~0.35us per-grid-step overhead, >=2 grid steps when B
    # allows (v7x has 2 TCs), capped at 2048 rows so double-buffered input plus f32
    # intermediates stay well under v5e's 16 MiB default scoped VMEM.
    if b_tile is None:
        half = _round_up(max(1, (B + 1) // 2), 128)
        b_tile = max(128, min(2048, half))
    else:
        b_tile = max(128, _round_up(int(b_tile), 128))
    B_pad = _round_up(B, b_tile)
    grid = (B_pad // b_tile,)

    # --- fold AvgPool1d(T) into the conv weights (both linear) ------------------
    #   mean_t conv(emb)[b,f,t] = b[f] + sum_{l,e} emb[b,l,e] * w_pooled[l*E+e, f]
    #   w_pooled[l*E+e, f] = (1/T) * sum_{k : 0 <= l-k < T} conv_w[f,e,k]
    l_idx = jnp.arange(L)[:, None]
    k_idx = jnp.arange(K)[None, :]
    valid = ((l_idx >= k_idx) & (l_idx - k_idx < T)).astype(jnp.float32)     # (L, K)
    w_pooled = (jnp.einsum('lk,fek->lef', valid,
                           conv_w.astype(jnp.float32)) / T).reshape(LE, F_)
    w_pooled = jnp.pad(w_pooled, ((0, LE_pad - LE), (0, 0))).astype(jnp.bfloat16)

    # --- embedding gather straight to bf16 (no f32 round-trip) ------------------
    # Pad the contraction dim by gathering extra zero "pad token" positions so the
    # gather directly produces the padded layout (no extra pad pass over activations).
    emb_tab = emb_w.astype(jnp.bfloat16)
    x_ids = x.astype(jnp.int32)
    pad_elems = LE_pad - LE
    if pad_elems and pad_elems % E == 0:
        n_pad_pos = pad_elems // E
        emb_tab = jnp.concatenate([emb_tab, jnp.zeros((1, E), jnp.bfloat16)], axis=0)
        pad_tok = jnp.full((B, n_pad_pos), emb_w.shape[0], dtype=jnp.int32)
        x_ids = jnp.concatenate([x_ids, pad_tok], axis=1)
        pad_elems = 0
    if B_pad > B:
        x_ids = jnp.pad(x_ids, ((0, B_pad - B), (0, 0)))     # token 0 rows (dropped)
    emb_flat = emb_tab[x_ids].reshape(B_pad, -1)             # (B_pad, LE_pad) bf16
    if pad_elems:                                            # fallback (E doesn't divide pad)
        emb_flat = jnp.pad(emb_flat, ((0, 0), (0, pad_elems)))

    bconv = conv_b.reshape(1, F_).astype(jnp.float32)
    wfc_col = fc_w.reshape(F_, 1).astype(jnp.float32)
    bfc = fc_b.reshape(1, 1).astype(jnp.float32)

    cost = pl.CostEstimate(
        flops=2 * B_pad * LE_pad * F_ + 4 * B_pad * F_,
        transcendentals=B_pad,
        bytes_accessed=(B_pad * LE_pad * 2 + LE_pad * F_ * 2
                        + (2 * F_ + 1) * 4 + B_pad * 4),
    )

    out_row = pl.pallas_call(
        cnn_kernel,
        out_shape=jax.ShapeDtypeStruct((1, B_pad), jnp.float32),
        grid=grid,
        in_specs=[
            pl.BlockSpec((b_tile, LE_pad), lambda i: (i, 0)),   # streamed activations
            pl.BlockSpec((LE_pad, F_), lambda i: (0, 0)),       # pooled conv weights
            pl.BlockSpec((1, F_), lambda i: (0, 0)),            # conv bias
            pl.BlockSpec((F_, 1), lambda i: (0, 0)),            # fc weight column
            pl.BlockSpec((1, 1), lambda i: (0, 0)),             # fc bias
        ],
        out_specs=pl.BlockSpec((1, b_tile), lambda i: (0, i)),  # lane-dense output row
        compiler_params=pltpu.CompilerParams(
            dimension_semantics=("parallel",),
            vmem_limit_bytes=32 * 1024 * 1024),
        cost_estimate=cost,
    )(emb_flat, w_pooled, bconv, wfc_col, bfc)

    return out_row[0, :B].reshape(B, 1)


def ref_forward(x, emb_w, conv_w, conv_b, fc_w, fc_b):
    """Pure-JAX reference matching the PyTorch module."""
    F_, E, K = conv_w.shape
    L = x.shape[1]
    T = L - K + 1
    emb = emb_w[x]                                                        # (B, L, E)
    windows = jnp.stack([emb[:, t:t + K, :] for t in range(T)], axis=1)   # (B, T, K, E)
    h1 = jnp.einsum('btke,fek->bft', windows, conv_w) + conv_b[None, :, None]
    h2 = jnp.mean(h1, axis=2)                                             # AvgPool1d(T)
    h3 = jnp.maximum(h2, 0.0) @ fc_w.T + fc_b                             # FC
    return jax.nn.sigmoid(h3)                                             # (B, 1)


if __name__ == "__main__":
    # Small, deterministic config consistent with the module defaults:
    # input_dim(L)=15, kernel=5, num_filter=128; small vocab/embedding dim.
    B, L, K = 4, 15, 5
    V, E, F_ = 50, 16, 128

    key = jax.random.PRNGKey(0)
    k_emb, k_cw, k_cb, k_fw, k_fb, k_x = jax.random.split(key, 6)

    emb_w = jax.random.normal(k_emb, (V, E), dtype=jnp.float32)
    conv_w = jax.random.normal(k_cw, (F_, E, K), dtype=jnp.float32) * (1.0 / (E * K) ** 0.5)
    conv_b = jax.random.normal(k_cb, (F_,), dtype=jnp.float32) * 0.01
    fc_w = jax.random.normal(k_fw, (1, F_), dtype=jnp.float32) * (1.0 / F_ ** 0.5)
    fc_b = jnp.zeros((1,), dtype=jnp.float32)

    x = jax.random.randint(k_x, (B, L), 0, V, dtype=jnp.int32)

    out = jax.block_until_ready(cnn_forward(x, emb_w, conv_w, conv_b, fc_w, fc_b))
    assert out.shape == (B, 1) and out.dtype == jnp.float32

    ref = jax.block_until_ready(ref_forward(x, emb_w, conv_w, conv_b, fc_w, fc_b))
    max_err = float(jnp.max(jnp.abs(out - ref)))
    assert max_err < 5e-2, f"max abs error {max_err}"
    print("KERNEL_OK")
</pallas_src>

<mosaic_0001>
module attributes {stable_mosaic.version = 11 : i64} {
  func.func @cnn_kernel(%arg0: i32, %arg1: memref<128x256xbf16, #tpu.memory_space<vmem>>, %arg2: memref<256x128xbf16, #tpu.memory_space<vmem>>, %arg3: memref<1x128xf32, #tpu.memory_space<vmem>>, %arg4: memref<128x1xf32, #tpu.memory_space<vmem>>, %arg5: memref<1x1xf32, #tpu.memory_space<vmem>>, %arg6: memref<1x128xf32, #tpu.memory_space<vmem>>) attributes {dimension_semantics = [#tpu.dimension_semantics<parallel>], iteration_bounds = array<i64: 1>, scalar_prefetch = 0 : i64, scratch_operands = 0 : i64, tpu.core_type = #tpu.core_type<tc>, window_params = [{transform_indices = @transform_0, window_bounds = array<i64: 128, 256>}, {pipeline_mode = #tpu.pipeline_mode<synchronous>, transform_indices = @transform_1, window_bounds = array<i64: 256, 128>}, {pipeline_mode = #tpu.pipeline_mode<synchronous>, transform_indices = @transform_2, window_bounds = array<i64: 1, 128>}, {pipeline_mode = #tpu.pipeline_mode<synchronous>, transform_indices = @transform_3, window_bounds = array<i64: 128, 1>}, {pipeline_mode = #tpu.pipeline_mode<synchronous>, transform_indices = @transform_4, window_bounds = array<i64: 1, 1>}, {transform_indices = @transform_5, window_bounds = array<i64: 1, 128>}]} {
    %c0 = arith.constant 0 : index
    %c0_0 = arith.constant 0 : index
    %0 = vector.load %arg1[%c0, %c0_0] : memref<128x256xbf16, #tpu.memory_space<vmem>>, vector<128x256xbf16>
    %c0_1 = arith.constant 0 : index
    %c0_2 = arith.constant 0 : index
    %1 = vector.load %arg2[%c0_1, %c0_2] : memref<256x128xbf16, #tpu.memory_space<vmem>>, vector<256x128xbf16>
    %cst = arith.constant dense<0.000000e+00> : vector<128x128xf32>
    %2 = tpu.matmul %0, %1, %cst {dimension_numbers = #tpu.dot_dimension_numbers<[1], [0], [0], [1], [0, 0, 1, 1], [], []>} : vector<128x256xbf16>, vector<256x128xbf16>, vector<128x128xf32> -> vector<128x128xf32>
    %c0_3 = arith.constant 0 : index
    %c0_4 = arith.constant 0 : index
    %3 = vector.load %arg3[%c0_3, %c0_4] : memref<1x128xf32, #tpu.memory_space<vmem>>, vector<1x128xf32>
    %4 = vector.broadcast %3 : vector<1x128xf32> to vector<128x128xf32>
    %5 = arith.addf %2, %4 : vector<128x128xf32>
    %cst_5 = arith.constant 0.000000e+00 : f32
    %6 = vector.broadcast %cst_5 : f32 to vector<128x128xf32>
    %7 = arith.maximumf %5, %6 : vector<128x128xf32>
    %8 = tpu.transpose %7, [1, 0] : vector<128x128xf32> -> vector<128x128xf32>
    %c0_6 = arith.constant 0 : index
    %c0_7 = arith.constant 0 : index
    %9 = vector.load %arg4[%c0_6, %c0_7] : memref<128x1xf32, #tpu.memory_space<vmem>>, vector<128x1xf32>
    %10 = vector.broadcast %9 : vector<128x1xf32> to vector<128x128xf32>
    %11 = arith.mulf %8, %10 : vector<128x128xf32>
    %cst_8 = arith.constant dense<0.000000e+00> : vector<128xf32>
    %12 = vector.multi_reduction <add>, %11, %cst_8 [0] : vector<128x128xf32> to vector<128xf32>
    %13 = vector.shape_cast %12 : vector<128xf32> to vector<1x128xf32>
    %c0_9 = arith.constant 0 : index
    %c0_10 = arith.constant 0 : index
    %14 = vector.load %arg5[%c0_9, %c0_10] : memref<1x1xf32, #tpu.memory_space<vmem>>, vector<1x1xf32>
    %15 = vector.broadcast %14 : vector<1x1xf32> to vector<1x128xf32>
    %16 = arith.addf %13, %15 : vector<1x128xf32>
    %17 = arith.negf %16 : vector<1x128xf32>
    %18 = math.exp %17 : vector<1x128xf32>
    %cst_11 = arith.constant 1.000000e+00 : f32
    %19 = vector.broadcast %cst_11 : f32 to vector<1x128xf32>
    %20 = arith.addf %19, %18 : vector<1x128xf32>
    %21 = arith.divf %19, %20 : vector<1x128xf32>
    %c0_12 = arith.constant 0 : index
    %c0_13 = arith.constant 0 : index
    %22 = vector.load %arg6[%c0_12, %c0_13] : memref<1x128xf32, #tpu.memory_space<vmem>>, vector<1x128xf32>
    tpu.vector_store %arg6[%c0_12, %c0_13], %21 {strides = array<i32>} : memref<1x128xf32, #tpu.memory_space<vmem>>, vector<1x128xf32>,
    return
  }
  func.func @transform_0(%arg0: i32) -> (i32, i32) {
    %c0_i32 = arith.constant 0 : i32
    %c0_i32_0 = arith.constant 0 : i32
    return %arg0, %c0_i32 : i32, i32
  }
  func.func @transform_1(%arg0: i32) -> (i32, i32) {
    %c0_i32 = arith.constant 0 : i32
    %c0_i32_0 = arith.constant 0 : i32
    %c0_i32_1 = arith.constant 0 : i32
    return %c0_i32, %c0_i32_0 : i32, i32
  }
  func.func @transform_2(%arg0: i32) -> (i32, i32) {
    %c0_i32 = arith.constant 0 : i32
    %c0_i32_0 = arith.constant 0 : i32
    %c0_i32_1 = arith.constant 0 : i32
    return %c0_i32, %c0_i32_0 : i32, i32
  }
  func.func @transform_3(%arg0: i32) -> (i32, i32) {
    %c0_i32 = arith.constant 0 : i32
    %c0_i32_0 = arith.constant 0 : i32
    %c0_i32_1 = arith.constant 0 : i32
    return %c0_i32, %c0_i32_0 : i32, i32
  }
  func.func @transform_4(%arg0: i32) -> (i32, i32) {
    %c0_i32 = arith.constant 0 : i32
    %c0_i32_0 = arith.constant 0 : i32
    %c0_i32_1 = arith.constant 0 : i32
    return %c0_i32, %c0_i32_0 : i32, i32
  }
  func.func @transform_5(%arg0: i32) -> (i32, i32) {
    %c0_i32 = arith.constant 0 : i32
    %c0_i32_0 = arith.constant 0 : i32
    return %c0_i32, %arg0 : i32, i32
  }
}

</mosaic_0001>

<llo_original>
// kernel: tpu_custom_call.1
$region0: #{tpu_custom_call.1}
  #allocation0 [shape = 'u32[]', space=smem, size = 0x4, offset = 0x4, fixed_abs, tag = 'smem constant byte address 0x4 - core index']
  #allocation1 [shape = 'u32[144,128]{1,0:T(1,128)}', space=vmem, size = 0x12000, scoped, tag = 'internal scratch']
  #allocation2 [shape = 'f32[1,1]{1,0:T(1,128)S(1)}', space=vmem, size = 0x200, scoped, tag = 'scoped memory for tpu_custom_call.1']
  %s0 = inlined_call_operand.vmem [shape: bf16[128,256], index: 0, kind: input, shape index: {}]
  %s1 = inlined_call_operand.hbm [shape: bf16[256,128], index: 1, kind: input, shape index: {}]
  %s2 = inlined_call_operand.vmem [shape: f32[1,128], index: 2, kind: input, shape index: {}]
  %s3 = inlined_call_operand.vmem [shape: f32[128,1], index: 3, kind: input, shape index: {}]
  %s4 = inlined_call_operand.<no memory space> [shape: f32[1,1], index: 4, kind: input, shape index: {}]
  %s5 = inlined_call_operand.hbm [shape: f32[1,128], index: 5, kind: output, shape index: {}]
  %s6 = sld [smem:[#allocation0]]
  $region34: #{tpu_custom_call.1} parent=0
    _
  %s8 = ssub.s32 1, %s6
  %s9 = scalar_select 0, %s8, %s6
  %v10 = vstv %s4
  %11 = vst [vmem:[#allocation2] sm:$0x1] %v10
  $region1: #{tpu_custom_call.1} parent=0
    #allocation3 [shape = 'u8[65536]{0}', space=vmem, size = 0x10000, scoped, tag = 'input window, operand 1, single buffered']
    #allocation4 [shape = 's32[1]{0}', space=sflag, size = 0x4, scoped, tag = 'scoped memory for tpu_custom_call.1']
    #allocation5 [shape = 's32[1]{0}', space=sflag, size = 0x4, scoped, tag = 'scoped memory for tpu_custom_call.1']
    #allocation6 [shape = 'u8[512]{0}', space=vmem, size = 0x400, scoped, tag = 'output window, operand 0, single buffered']
    %12 = vsyncpa [#allocation4], 0
    %13 = vsyncpa [#allocation5], 0
    // Predicated region
    $region2: #{tpu_custom_call.1} parent=1 // pred_check
      _
    $region3: #{tpu_custom_call.1} parent=1 // pred_check_branch
      %15 = sbr.rel (0) target = $region5
    $region4: #{tpu_custom_call.1} parent=1 // pred_region
      _
    $region5: #{tpu_custom_call.1} parent=1 // pred_fallthru
      _
    // Predicated region
    $region6: #{tpu_custom_call.1} parent=1 // pred_check
      _
    $region7: #{tpu_custom_call.1} parent=1 // pred_check_branch
      %17 = sbr.rel (0) target = $region9
    $region8: #{tpu_custom_call.1} parent=1 // pred_region
      %s19 = ssub.s32 2048, 2048
      %20 = vsyncadd [#allocation4], %s19
      %s21 = sshll.u32 [#allocation3], 4
      %s22 = int_to_ptr.vmem [resolvable:$true] %s21
      %27 = dma.hbm_to_vmem [thread:$0]  %s1, 2048, %s22, [#allocation4], 64, 64, 4
    $region9: #{tpu_custom_call.1} parent=1 // pred_fallthru
      _
    // Predicated region
    $region10: #{tpu_custom_call.1} parent=1 // pred_check
      _
    $region11: #{tpu_custom_call.1} parent=1 // pred_check_branch
      %29 = sbr.rel (0) target = $region13
    $region12: #{tpu_custom_call.1} parent=1 // pred_region
      _
    $region13: #{tpu_custom_call.1} parent=1 // pred_fallthru
      _
    // Predicated region
    $region14: #{tpu_custom_call.1} parent=1 // pred_check
      _
    $region15: #{tpu_custom_call.1} parent=1 // pred_check_branch
      %31 = sbr.rel (0) target = $region17
    $region16: #{tpu_custom_call.1} parent=1 // pred_region
      _
    $region17: #{tpu_custom_call.1} parent=1 // pred_fallthru
      _
    // Predicated region
    $region18: #{tpu_custom_call.1} parent=1 // pred_check
      _
    $region19: #{tpu_custom_call.1} parent=1 // pred_check_branch
      %33 = sbr.rel (0) target = $region21
    $region20: #{tpu_custom_call.1} parent=1 // pred_region
      _
    $region21: #{tpu_custom_call.1} parent=1 // pred_fallthru
      _
    // Predicated region
    $region22: #{tpu_custom_call.1} parent=1 // pred_check
      _
    $region23: #{tpu_custom_call.1} parent=1 // pred_check_branch
      %35 = sbr.rel (0) target = $region25
    $region24: #{tpu_custom_call.1} parent=1 // pred_region
      %36 = dma.done [#allocation4], 2048
    $region25: #{tpu_custom_call.1} parent=1 // pred_fallthru
      _
    %v38 = vld [vmem:[%s0] sm:$0xff]
    %v39 = vld [vmem:[%s0 + $0x8] sm:$0xff]
    %v40 = vld [vmem:[%s0 + $0x10] sm:$0xff]
    %v41 = vld [vmem:[%s0 + $0x18] sm:$0xff]
    %v42 = vld [vmem:[%s0 + $0x20] sm:$0xff]
    %v43 = vld [vmem:[%s0 + $0x28] sm:$0xff]
    %v44 = vld [vmem:[%s0 + $0x30] sm:$0xff]
    %v45 = vld [vmem:[%s0 + $0x38] sm:$0xff]
    %v46 = vld [vmem:[%s0 + $0x40] sm:$0xff]
    %v47 = vld [vmem:[%s0 + $0x48] sm:$0xff]
    %v48 = vld [vmem:[%s0 + $0x50] sm:$0xff]
    %v49 = vld [vmem:[%s0 + $0x58] sm:$0xff]
    %v50 = vld [vmem:[%s0 + $0x60] sm:$0xff]
    %v51 = vld [vmem:[%s0 + $0x68] sm:$0xff]
    %v52 = vld [vmem:[%s0 + $0x70] sm:$0xff]
    %v53 = vld [vmem:[%s0 + $0x78] sm:$0xff]
    %v54 = vld [vmem:[#allocation3] sm:$0xf]
    %v55 = vld [vmem:[#allocation3 + $0x4] sm:$0xf]
    %v56 = vld [vmem:[#allocation3 + $0x8] sm:$0xf]
    %v57 = vld [vmem:[#allocation3 + $0xc] sm:$0xf]
    %v58 = vld [vmem:[#allocation3 + $0x10] sm:$0xf]
    %v59 = vld [vmem:[#allocation3 + $0x14] sm:$0xf]
    %v60 = vld [vmem:[#allocation3 + $0x18] sm:$0xf]
    %v61 = vld [vmem:[#allocation3 + $0x1c] sm:$0xf]
    %v62 = vld [vmem:[#allocation3 + $0x20] sm:$0xf]
    %v63 = vld [vmem:[#allocation3 + $0x24] sm:$0xf]
    %v64 = vld [vmem:[#allocation3 + $0x28] sm:$0xf]
    %v65 = vld [vmem:[#allocation3 + $0x2c] sm:$0xf]
    %v66 = vld [vmem:[#allocation3 + $0x30] sm:$0xf]
    %v67 = vld [vmem:[#allocation3 + $0x34] sm:$0xf]
    %v68 = vld [vmem:[#allocation3 + $0x38] sm:$0xf]
    %v69 = vld [vmem:[#allocation3 + $0x3c] sm:$0xf]
    %v70 = vld [vmem:[#allocation3 + $0x40] sm:$0xf]
    %v71 = vld [vmem:[#allocation3 + $0x44] sm:$0xf]
    %v72 = vld [vmem:[#allocation3 + $0x48] sm:$0xf]
    %v73 = vld [vmem:[#allocation3 + $0x4c] sm:$0xf]
    %v74 = vld [vmem:[#allocation3 + $0x50] sm:$0xf]
    %v75 = vld [vmem:[#allocation3 + $0x54] sm:$0xf]
    %v76 = vld [vmem:[#allocation3 + $0x58] sm:$0xf]
    %v77 = vld [vmem:[#allocation3 + $0x5c] sm:$0xf]
    %v78 = vld [vmem:[#allocation3 + $0x60] sm:$0xf]
    %v79 = vld [vmem:[#allocation3 + $0x64] sm:$0xf]
    %v80 = vld [vmem:[#allocation3 + $0x68] sm:$0xf]
    %v81 = vld [vmem:[#allocation3 + $0x6c] sm:$0xf]
    %v82 = vld [vmem:[#allocation3 + $0x70] sm:$0xf]
    %v83 = vld [vmem:[#allocation3 + $0x74] sm:$0xf]
    %v84 = vld [vmem:[#allocation3 + $0x78] sm:$0xf]
    %v85 = vld [vmem:[#allocation3 + $0x7c] sm:$0xf]
    %v86 = vld [vmem:[%s2] sm:$0x1]
    %v88 = vlaneseq
    %v89 = vshrl.u32 %v88, 7
    %v90 = vsub.s32 0, %v89
    %v91 = vrot.slane %v86, %v90
    %v109 = vunpack.c.l.b16 %v38
    %v110 = vunpack.c.h.b16 %v38
    %v111 = vunpack.c.l.b16 %v39
    %v112 = vunpack.c.h.b16 %v39
    %v113 = vunpack.c.l.b16 %v40
    %v114 = vunpack.c.h.b16 %v40
    %v115 = vunpack.c.l.b16 %v41
    %v116 = vunpack.c.h.b16 %v41
    %v117 = vunpack.c.l.b16 %v42
    %v118 = vunpack.c.h.b16 %v42
    %v119 = vunpack.c.l.b16 %v43
    %v120 = vunpack.c.h.b16 %v43
    %v121 = vunpack.c.l.b16 %v44
    %v122 = vunpack.c.h.b16 %v44
    %v123 = vunpack.c.l.b16 %v45
    %v124 = vunpack.c.h.b16 %v45
    %v125 = vunpack.c.l.b16 %v46
    %v126 = vunpack.c.h.b16 %v46
    %v127 = vunpack.c.l.b16 %v47
    %v128 = vunpack.c.h.b16 %v47
    %v129 = vunpack.c.l.b16 %v48
    %v130 = vunpack.c.h.b16 %v48
    %v131 = vunpack.c.l.b16 %v49
    %v132 = vunpack.c.h.b16 %v49
    %v133 = vunpack.c.l.b16 %v50
    %v134 = vunpack.c.h.b16 %v50
    %v135 = vunpack.c.l.b16 %v51
    %v136 = vunpack.c.h.b16 %v51
    %v137 = vunpack.c.l.b16 %v52
    %v138 = vunpack.c.h.b16 %v52
    %v139 = vunpack.c.l.b16 %v53
    %v140 = vunpack.c.h.b16 %v53
    %v141 = vpack.c.b16 %v111, %v109
    %v142 = vpack.c.b16 %v112, %v110
    %v143 = vpack.c.b16 %v115, %v113
    %v144 = vpack.c.b16 %v116, %v114
    %v145 = vpack.c.b16 %v119, %v117
    %v146 = vpack.c.b16 %v120, %v118
    %v147 = vpack.c.b16 %v123, %v121
    %v148 = vpack.c.b16 %v124, %v122
    %v149 = vpack.c.b16 %v127, %v125
    %v150 = vpack.c.b16 %v128, %v126
    %v151 = vpack.c.b16 %v131, %v129
    %v152 = vpack.c.b16 %v132, %v130
    %v153 = vpack.c.b16 %v135, %v133
    %v154 = vpack.c.b16 %v136, %v134
    %v155 = vpack.c.b16 %v139, %v137
    %v156 = vpack.c.b16 %v140, %v138
    %v205 = vunpack.c.l.b16 %v54
    %v206 = vunpack.c.l.b16 %v55
    %v207 = vunpack.c.l.b16 %v56
    %v208 = vunpack.c.l.b16 %v57
    %v209 = vunpack.c.l.b16 %v58
    %v210 = vunpack.c.l.b16 %v59
    %v211 = vunpack.c.l.b16 %v60
    %v212 = vunpack.c.l.b16 %v61
    %v213 = vunpack.c.l.b16 %v62
    %v214 = vunpack.c.l.b16 %v63
    %v215 = vunpack.c.l.b16 %v64
    %v216 = vunpack.c.l.b16 %v65
    %v217 = vunpack.c.l.b16 %v66
    %v218 = vunpack.c.l.b16 %v67
    %v219 = vunpack.c.l.b16 %v68
    %v220 = vunpack.c.l.b16 %v69
    %v221 = vunpack.c.l.b16 %v70
    %v222 = vunpack.c.l.b16 %v71
    %v223 = vunpack.c.l.b16 %v72
    %v224 = vunpack.c.l.b16 %v73
    %v225 = vunpack.c.l.b16 %v74
    %v226 = vunpack.c.l.b16 %v75
    %v227 = vunpack.c.l.b16 %v76
    %v228 = vunpack.c.l.b16 %v77
    %v229 = vunpack.c.l.b16 %v78
    %v230 = vunpack.c.l.b16 %v79
    %v231 = vunpack.c.l.b16 %v80
    %v232 = vunpack.c.l.b16 %v81
    %v233 = vunpack.c.l.b16 %v82
    %v234 = vunpack.c.l.b16 %v83
    %v235 = vunpack.c.l.b16 %v84
    %v236 = vunpack.c.l.b16 %v85
    %v237 = vpack.c.b16 %v206, %v205
    %v238 = vpack.c.b16 %v208, %v207
    %v239 = vpack.c.b16 %v210, %v209
    %v240 = vpack.c.b16 %v212, %v211
    %v241 = vpack.c.b16 %v214, %v213
    %v242 = vpack.c.b16 %v216, %v215
    %v243 = vpack.c.b16 %v218, %v217
    %v244 = vpack.c.b16 %v220, %v219
    %v245 = vpack.c.b16 %v222, %v221
    %v246 = vpack.c.b16 %v224, %v223
    %v247 = vpack.c.b16 %v226, %v225
    %v248 = vpack.c.b16 %v228, %v227
    %v249 = vpack.c.b16 %v230, %v229
    %v250 = vpack.c.b16 %v232, %v231
    %v251 = vpack.c.b16 %v234, %v233
    %v252 = vpack.c.b16 %v236, %v235
    %269 = vmatprep.subr.bf16.mxu0 0
    %270 = vmatpush1.bf16.msra.mxu0 %v237
    %271 = vmatprep.subr.bf16.mxu0 0
    %272 = vmatpush1.bf16.msra.mxu0 %v238
    %273 = vmatprep.subr.bf16.mxu0 0
    %274 = vmatpush1.bf16.msra.mxu0 %v239
    %275 = vmatprep.subr.bf16.mxu0 0
    %276 = vmatpush1.bf16.msra.mxu0 %v240
    %277 = vmatprep.subr.bf16.mxu0 0
    %278 = vmatpush1.bf16.msra.mxu0 %v241
    %279 = vmatprep.subr.bf16.mxu0 0
    %280 = vmatpush1.bf16.msra.mxu0 %v242
    %281 = vmatprep.subr.bf16.mxu0 0
    %282 = vmatpush1.bf16.msra.mxu0 %v243
    %283 = vmatprep.subr.bf16.mxu0 0
    %284 = vmatpush1.bf16.msra.mxu0 %v244
    %285 = vmatprep.subr.bf16.mxu0 0
    %286 = vmatpush1.bf16.msra.mxu0 %v245
    %287 = vmatprep.subr.bf16.mxu0 0
    %288 = vmatpush1.bf16.msra.mxu0 %v246
    %289 = vmatprep.subr.bf16.mxu0 0
    %290 = vmatpush1.bf16.msra.mxu0 %v247
    %291 = vmatprep.subr.bf16.mxu0 0
    %292 = vmatpush1.bf16.msra.mxu0 %v248
    %293 = vmatprep.subr.bf16.mxu0 0
    %294 = vmatpush1.bf16.msra.mxu0 %v249
    %295 = vmatprep.subr.bf16.mxu0 0
    %296 = vmatpush1.bf16.msra.mxu0 %v250
    %297 = vmatprep.subr.bf16.mxu0 0
    %298 = vmatpush1.bf16.msra.mxu0 %v251
    %299 = vmatprep.subr.bf16.mxu0 0
    %300 = vmatpush1.bf16.msra.mxu0 %v252
    %301 = vmatprep.mubr.bf16.mxu0 %v142
    %302 = vmatmul.mubr.bf16.gmra.mrb[0].mxu0 %v141
    %v303 = vpop.f32.mrb[0].mxu0
    %v304 = vadd.f32 %v91, %v303
    %v305 = vpop.f32.mrb[0].mxu0
    %v306 = vpop.f32.mrb[0].mxu0
    %v307 = vadd.f32 %v91, %v306
    %v308 = vpop.f32.mrb[0].mxu0
    %309 = vmatprep.mubr.bf16.mxu0 %v144
    %310 = vmatmul.mubr.bf16.gmra.mrb[0].mxu0 %v143
    %v311 = vpop.f32.mrb[0].mxu0
    %v312 = vadd.f32 %v91, %v311
    %v313 = vpop.f32.mrb[0].mxu0
    %v314 = vpop.f32.mrb[0].mxu0
    %v315 = vadd.f32 %v91, %v314
    %v316 = vpop.f32.mrb[0].mxu0
    %317 = vmatprep.mubr.bf16.mxu0 %v146
    %318 = vmatmul.mubr.bf16.gmra.mrb[0].mxu0 %v145
    %v319 = vpop.f32.mrb[0].mxu0
    %v320 = vadd.f32 %v91, %v319
    %v321 = vpop.f32.mrb[0].mxu0
    %v322 = vpop.f32.mrb[0].mxu0
    %v323 = vadd.f32 %v91, %v322
    %v324 = vpop.f32.mrb[0].mxu0
    %325 = vmatprep.mubr.bf16.mxu0 %v148
    %326 = vmatmul.mubr.bf16.gmra.mrb[0].mxu0 %v147
    %v327 = vpop.f32.mrb[0].mxu0
    %v328 = vadd.f32 %v91, %v327
    %v329 = vpop.f32.mrb[0].mxu0
    %v330 = vpop.f32.mrb[0].mxu0
    %v331 = vadd.f32 %v91, %v330
    %v332 = vpop.f32.mrb[0].mxu0
    %333 = vmatprep.mubr.bf16.mxu0 %v150
    %334 = vmatmul.mubr.bf16.gmra.mrb[0].mxu0 %v149
    %v335 = vpop.f32.mrb[0].mxu0
    %v336 = vadd.f32 %v91, %v335
    %v337 = vpop.f32.mrb[0].mxu0
    %v338 = vpop.f32.mrb[0].mxu0
    %v339 = vadd.f32 %v91, %v338
    %v340 = vpop.f32.mrb[0].mxu0
    %341 = vmatprep.mubr.bf16.mxu0 %v152
    %342 = vmatmul.mubr.bf16.gmra.mrb[0].mxu0 %v151
    %v343 = vpop.f32.mrb[0].mxu0
    %v344 = vadd.f32 %v91, %v343
    %v345 = vpop.f32.mrb[0].mxu0
    %v346 = vpop.f32.mrb[0].mxu0
    %v347 = vadd.f32 %v91, %v346
    %v348 = vpop.f32.mrb[0].mxu0
    %349 = vmatprep.mubr.bf16.mxu0 %v154
    %350 = vmatmul.mubr.bf16.gmra.mrb[0].mxu0 %v153
    %v351 = vpop.f32.mrb[0].mxu0
    %v352 = vadd.f32 %v91, %v351
    %v353 = vpop.f32.mrb[0].mxu0
    %v354 = vpop.f32.mrb[0].mxu0
    %v355 = vadd.f32 %v91, %v354
    %v356 = vpop.f32.mrb[0].mxu0
    %357 = vmatprep.mubr.bf16.mxu0 %v156
    %358 = vmatmul.mubr.bf16.gmra.mrb[0].mxu0 %v155
    %v359 = vpop.f32.mrb[0].mxu0
    %v360 = vadd.f32 %v91, %v359
    %v361 = vpop.f32.mrb[0].mxu0
    %v362 = vpop.f32.mrb[0].mxu0
    %v363 = vadd.f32 %v91, %v362
    %v364 = vpop.f32.mrb[0].mxu0
    %365 = vdwg.mxu0
    %v366 = vmax.f32 %v304, 0.0
    %v367 = vmax.f32 %v307, 0.0
    %v368 = vmax.f32 %v312, 0.0
    %v369 = vmax.f32 %v315, 0.0
    %v370 = vmax.f32 %v320, 0.0
    %v371 = vmax.f32 %v323, 0.0
    %v372 = vmax.f32 %v328, 0.0
    %v373 = vmax.f32 %v331, 0.0
    %v374 = vmax.f32 %v336, 0.0
    %v375 = vmax.f32 %v339, 0.0
    %v376 = vmax.f32 %v344, 0.0
    %v377 = vmax.f32 %v347, 0.0
    %v378 = vmax.f32 %v352, 0.0
    %v379 = vmax.f32 %v355, 0.0
    %v380 = vmax.f32 %v360, 0.0
    %v381 = vmax.f32 %v363, 0.0
    %382 = vxpose.xlu0.b32.start [1/16] %v366, 128
    %383 = vxpose.xlu0.b32.cont [2/16] %v367, 128
    %384 = vxpose.xlu0.b32.cont [3/16] %v368, 128
    %385 = vxpose.xlu0.b32.cont [4/16] %v369, 128
    %386 = vxpose.xlu0.b32.cont [5/16] %v370, 128
    %387 = vxpose.xlu0.b32.cont [6/16] %v371, 128
    %388 = vxpose.xlu0.b32.cont [7/16] %v372, 128
    %389 = vxpose.xlu0.b32.cont [8/16] %v373, 128
    %390 = vxpose.xlu0.b32.cont [9/16] %v374, 128
    %391 = vxpose.xlu0.b32.cont [10/16] %v375, 128
    %392 = vxpose.xlu0.b32.cont [11/16] %v376, 128
    %393 = vxpose.xlu0.b32.cont [12/16] %v377, 128
    %394 = vxpose.xlu0.b32.cont [13/16] %v378, 128
    %395 = vxpose.xlu0.b32.cont [14/16] %v379, 128
    %396 = vxpose.xlu0.b32.cont [15/16] %v380, 128
    %397 = vxpose.xlu0.b32.end [16/16] %v381, 128
    %v398 = vpop.trf.xlu0
    %v399 = vpop.trf.xlu0
    %v400 = vpop.trf.xlu0
    %v401 = vpop.trf.xlu0
    %v402 = vpop.trf.xlu0
    %v403 = vpop.trf.xlu0
    %v404 = vpop.trf.xlu0
    %v405 = vpop.trf.xlu0
    %v406 = vpop.trf.xlu0
    %v407 = vpop.trf.xlu0
    %v408 = vpop.trf.xlu0
    %v409 = vpop.trf.xlu0
    %v410 = vpop.trf.xlu0
    %v411 = vpop.trf.xlu0
    %v412 = vpop.trf.xlu0
    %v413 = vpop.trf.xlu0
    %v414 = vld [vmem:[%s3] sm:$0xff]
    %v415 = vld [vmem:[%s3 + $0x8] sm:$0xff]
    %v416 = vld [vmem:[%s3 + $0x10] sm:$0xff]
    %v417 = vld [vmem:[%s3 + $0x18] sm:$0xff]
    %v418 = vld [vmem:[%s3 + $0x20] sm:$0xff]
    %v419 = vld [vmem:[%s3 + $0x28] sm:$0xff]
    %v420 = vld [vmem:[%s3 + $0x30] sm:$0xff]
    %v421 = vld [vmem:[%s3 + $0x38] sm:$0xff]
    %v422 = vld [vmem:[%s3 + $0x40] sm:$0xff]
    %v423 = vld [vmem:[%s3 + $0x48] sm:$0xff]
    %v424 = vld [vmem:[%s3 + $0x50] sm:$0xff]
    %v425 = vld [vmem:[%s3 + $0x58] sm:$0xff]
    %v426 = vld [vmem:[%s3 + $0x60] sm:$0xff]
    %v427 = vld [vmem:[%s3 + $0x68] sm:$0xff]
    %v428 = vld [vmem:[%s3 + $0x70] sm:$0xff]
    %v429 = vld [vmem:[%s3 + $0x78] sm:$0xff]
    %431 = vset.pattern.permute.xlu0 0
    %432 = vperm.xlu0 %431, %v414
    %v433 = vpop.permute.xlu0 %432
    %436 = vset.pattern.permute.xlu0 0
    %437 = vperm.xlu0 %436, %v415
    %v438 = vpop.permute.xlu0 %437
    %441 = vset.pattern.permute.xlu0 0
    %442 = vperm.xlu0 %441, %v416
    %v443 = vpop.permute.xlu0 %442
    %446 = vset.pattern.permute.xlu0 0
    %447 = vperm.xlu0 %446, %v417
    %v448 = vpop.permute.xlu0 %447
    %451 = vset.pattern.permute.xlu0 0
    %452 = vperm.xlu0 %451, %v418
    %v453 = vpop.permute.xlu0 %452
    %456 = vset.pattern.permute.xlu0 0
    %457 = vperm.xlu0 %456, %v419
    %v458 = vpop.permute.xlu0 %457
    %461 = vset.pattern.permute.xlu0 0
    %462 = vperm.xlu0 %461, %v420
    %v463 = vpop.permute.xlu0 %462
    %466 = vset.pattern.permute.xlu0 0
    %467 = vperm.xlu0 %466, %v421
    %v468 = vpop.permute.xlu0 %467
    %471 = vset.pattern.permute.xlu0 0
    %472 = vperm.xlu0 %471, %v422
    %v473 = vpop.permute.xlu0 %472
    %476 = vset.pattern.permute.xlu0 0
    %477 = vperm.xlu0 %476, %v423
    %v478 = vpop.permute.xlu0 %477
    %481 = vset.pattern.permute.xlu0 0
    %482 = vperm.xlu0 %481, %v424
    %v483 = vpop.permute.xlu0 %482
    %486 = vset.pattern.permute.xlu0 0
    %487 = vperm.xlu0 %486, %v425
    %v488 = vpop.permute.xlu0 %487
    %491 = vset.pattern.permute.xlu0 0
    %492 = vperm.xlu0 %491, %v426
    %v493 = vpop.permute.xlu0 %492
    %496 = vset.pattern.permute.xlu0 0
    %497 = vperm.xlu0 %496, %v427
    %v498 = vpop.permute.xlu0 %497
    %501 = vset.pattern.permute.xlu0 0
    %502 = vperm.xlu0 %501, %v428
    %v503 = vpop.permute.xlu0 %502
    %506 = vset.pattern.permute.xlu0 0
    %507 = vperm.xlu0 %506, %v429
    %v508 = vpop.permute.xlu0 %507
    %v510 = vmul.f32 %v398, %v433
    %v511 = vmul.f32 %v399, %v438
    %v512 = vmul.f32 %v400, %v443
    %v513 = vmul.f32 %v401, %v448
    %v514 = vmul.f32 %v402, %v453
    %v515 = vmul.f32 %v403, %v458
    %v516 = vmul.f32 %v404, %v463
    %v517 = vmul.f32 %v405, %v468
    %v518 = vmul.f32 %v406, %v473
    %v519 = vmul.f32 %v407, %v478
    %v520 = vmul.f32 %v408, %v483
    %v521 = vmul.f32 %v409, %v488
    %v522 = vmul.f32 %v410, %v493
    %v523 = vmul.f32 %v411, %v498
    %v524 = vmul.f32 %v412, %v503
    %v525 = vmul.f32 %v413, %v508
    %v526 = vadd.f32 %v510, %v511
    %v527 = vadd.f32 %v526, %v512
    %v528 = vadd.f32 %v527, %v513
    %v529 = vadd.f32 %v528, %v514
    %v530 = vadd.f32 %v529, %v515
    %v531 = vadd.f32 %v530, %v516
    %v532 = vadd.f32 %v531, %v517
    %v533 = vadd.f32 %v532, %v518
    %v534 = vadd.f32 %v533, %v519
    %v535 = vadd.f32 %v534, %v520
    %v536 = vadd.f32 %v535, %v521
    %v537 = vadd.f32 %v536, %v522
    %v538 = vadd.f32 %v537, %v523
    %v539 = vadd.f32 %v538, %v524
    %v540 = vadd.f32 %v539, %v525
    %v541 = vrot.slane %v540, 4
    %v542 = vadd.f32 %v540, %v541
    %v543 = vrot.slane %v542, 2
    %v544 = vadd.f32 %v542, %v543
    %v545 = vrot.slane %v544, 1
    %v546 = vadd.f32 %v544, %v545
    %v547 = vld [vmem:[#allocation2] sm:$0x1]
    %549 = vset.pattern.permute.xlu0 0
    %550 = vperm.xlu0 %549, %v547
    %v551 = vpop.permute.xlu0 %550
    %v553 = vlaneseq
    %v554 = vshrl.u32 %v553, 7
    %v555 = vsub.s32 0, %v554
    %v556 = vrot.slane %v551, %v555
    %v557 = vadd.f32 %v546, %v556
    %v558 = vxor.u32 %v557, 2147483648
    %v559 = vmul.f32 %v558, 1.442695
    %v560 = vpow.pop %v559
    %v561 = vadd.f32 %v560, 1.0
    %v562 = vrcp.pop %v561
    %v563 = vmul.f32 1.0, %v562
    %564 = vst [vmem:[#allocation6] sm:$0x1] %v563
    // Predicated region
    $region26: #{tpu_custom_call.1} parent=1 // pred_check
      _
    $region27: #{tpu_custom_call.1} parent=1 // pred_check_branch
      %566 = sbr.rel (0) target = $region29
    $region28: #{tpu_custom_call.1} parent=1 // pred_region
      %s568 = ssub.s32 16, 16
      %569 = vsyncadd [#allocation5], %s568
      %s571 = sshll.u32 [#allocation6], 4
      %s572 = int_to_ptr.vmem [resolvable:$true] %s571
      %574 = dma.vmem_to_hbm [thread:$0]  %s572, 16, %s5, [#allocation5]
    $region29: #{tpu_custom_call.1} parent=1 // pred_fallthru
      _
    // Predicated region
    $region30: #{tpu_custom_call.1} parent=1 // pred_check
      _
    $region31: #{tpu_custom_call.1} parent=1 // pred_check_branch
      %576 = sbr.rel (0) target = $region33
    $region32: #{tpu_custom_call.1} parent=1 // pred_region
      %577 = dma.done [#allocation5], 16
    $region33: #{tpu_custom_call.1} parent=1 // pred_fallthru
      _
    %578 = vsyncpa [#allocation4], 1
    %579 = vsyncpa [#allocation5], 1

</llo_original>
